<compile_context>
chip_gen: v5e
topology: v5e:2x2
jax: 0.10.0
libtpu: 0.0.40
codegen_flags: <defaults>
</compile_context>

<pallas_src>
import functools

import jax
import jax.numpy as jnp
from jax.experimental import pallas as pl
from jax.experimental.pallas import tpu as pltpu

H1, H2, H3 = 64, 128, 64


def qnetwork_kernel(x_ref,
                    w1_ref, b1_ref,
                    w2_ref, b2_ref,
                    w3_ref, b3_ref,
                    w4_ref, b4_ref,
                    out_ref):
    """Fused MLP forward: 3x (Linear + ReLU) + final Linear.

    x_ref is the raw f32 state tile (TB, S); it is cast to the weight dtype
    (bf16) in-kernel. Matmuls accumulate in f32 on the MXU; bias add and ReLU
    stay in f32.
    """
    x = x_ref[...].astype(w1_ref.dtype)              # (TB, S) -> bf16

    # dense1: (TB, S) @ (S, 64) -> relu   (MXU pads K=S internally)
    h = jnp.dot(x, w1_ref[...], preferred_element_type=jnp.float32) + b1_ref[...]
    h = jnp.maximum(h, 0.0)

    # dense2: (TB, 64) @ (64, 128) -> relu
    h = jnp.dot(h.astype(w2_ref.dtype), w2_ref[...],
                preferred_element_type=jnp.float32) + b2_ref[...]
    h = jnp.maximum(h, 0.0)

    # dense3: (TB, 128) @ (128, 64) -> relu
    h = jnp.dot(h.astype(w3_ref.dtype), w3_ref[...],
                preferred_element_type=jnp.float32) + b3_ref[...]
    h = jnp.maximum(h, 0.0)

    # output: (TB, 64) @ (64, A)  (no activation; true action width, no padding)
    y = jnp.dot(h.astype(w4_ref.dtype), w4_ref[...],
                preferred_element_type=jnp.float32) + b4_ref[...]
    out_ref[...] = y.astype(out_ref.dtype)


def _round_up(x, m):
    return ((x + m - 1) // m) * m


def qnetwork_forward(state, params, *, block_batch=512):
    """Batch-gridded pallas_call with VMEM-resident weights, natural shapes."""
    (w1, b1), (w2, b2), (w3, b3), (w4, b4) = params
    B, S = state.shape
    A = w4.shape[1]

    # Tile choice:
    #   * act()-style (B <= block_batch): single tile, TB rounded to 8
    #     (f32 input sublane) so the common 8-aligned case needs no batch
    #     padding and no output slice -> one XLA op total.
    #   * learn()-style: 16-aligned large tiles (default 512) to amortize the
    #     ~0.35 us/step grid overhead; guard any caller-supplied block_batch.
    bb = max(16, _round_up(block_batch, 16))
    TB = _round_up(B, 8) if B <= bb else bb
    B_pad = _round_up(B, TB)

    x = state
    if B_pad != B:
        x = jnp.zeros((B_pad, S), state.dtype).at[:B, :].set(state)

    grid = (B_pad // TB,)

    def resident(arr):
        nd = arr.ndim
        return pl.BlockSpec(arr.shape, lambda i, _nd=nd: (0,) * _nd)

    wbytes = jnp.dtype(w1.dtype).itemsize
    flops = 2 * B_pad * (S * H1 + H1 * H2 + H2 * H3 + H3 * A)
    bytes_accessed = (
        B_pad * S * jnp.dtype(state.dtype).itemsize                 # state in
        + (S * H1 + H1 * H2 + H2 * H3 + H3 * A) * wbytes            # weights
        + (H1 + H2 + H3 + A) * 4                                    # biases (f32)
        + B_pad * A * 4                                             # output (f32)
    )

    out = pl.pallas_call(
        qnetwork_kernel,
        out_shape=jax.ShapeDtypeStruct((B_pad, A), jnp.float32),
        grid_spec=pltpu.PrefetchScalarGridSpec(
            num_scalar_prefetch=0,
            grid=grid,
            in_specs=[
                pl.BlockSpec((TB, S), lambda i: (i, 0)),   # streamed state tile
                resident(w1), resident(b1),
                resident(w2), resident(b2),
                resident(w3), resident(b3),
                resident(w4), resident(b4),
            ],
            out_specs=pl.BlockSpec((TB, A), lambda i: (i, 0)),
        ),
        compiler_params=pltpu.CompilerParams(
            dimension_semantics=("parallel",)),
        cost_estimate=pl.CostEstimate(
            flops=flops, transcendentals=0, bytes_accessed=bytes_accessed),
    )(x, w1, b1, w2, b2, w3, b3, w4, b4)

    if B_pad != B:
        out = out[:B]
    return out


def init_linear(key, fan_in, fan_out, *, w_dtype=jnp.bfloat16):
    """PyTorch nn.Linear default init: U(-1/sqrt(fan_in), 1/sqrt(fan_in)).
    Weight stored transposed vs. PyTorch, i.e. (fan_in, fan_out), for x @ W.
    Weights in bf16 (MXU-native), biases kept f32 and shaped (1, fan_out)."""
    kw, kb = jax.random.split(key)
    bound = 1.0 / jnp.sqrt(jnp.float32(fan_in))
    w = jax.random.uniform(kw, (fan_in, fan_out), jnp.float32, -bound, bound)
    b = jax.random.uniform(kb, (1, fan_out), jnp.float32, -bound, bound)
    return w.astype(w_dtype), b


def make_params(key, state_size, action_size, *, w_dtype=jnp.bfloat16):
    k1, k2, k3, k4 = jax.random.split(key, 4)
    return (
        init_linear(k1, state_size, H1, w_dtype=w_dtype),
        init_linear(k2, H1, H2, w_dtype=w_dtype),
        init_linear(k3, H2, H3, w_dtype=w_dtype),
        init_linear(k4, H3, action_size, w_dtype=w_dtype),
    )


def reference_forward(state, params):
    """Pure-JAX reference using the same mixed precision (bf16 matmuls,
    f32 accumulation / bias / ReLU)."""
    def dense(x, w, b):
        return jnp.dot(x.astype(w.dtype), w, preferred_element_type=jnp.float32) + b

    (w1, b1), (w2, b2), (w3, b3), (w4, b4) = params
    h = jnp.maximum(dense(state, w1, b1), 0.0)
    h = jnp.maximum(dense(h, w2, b2), 0.0)
    h = jnp.maximum(dense(h, w3, b3), 0.0)
    return dense(h, w4, b4)


if __name__ == "__main__":
    # Small shapes consistent with the Banana-navigation QNetwork.
    STATE_SIZE = 37
    ACTION_SIZE = 4

    key = jax.random.PRNGKey(0)
    k_params, k_state1, k_state2 = jax.random.split(key, 3)
    params = make_params(k_params, STATE_SIZE, ACTION_SIZE)

    # Case 1: tiny act()-style batch -> single tile, no batch pad, no slice.
    state_small = jax.random.normal(k_state1, (8, STATE_SIZE), dtype=jnp.float32)
    fwd = jax.jit(functools.partial(qnetwork_forward, block_batch=512))
    out_small = jax.block_until_ready(fwd(state_small, params))
    ref_small = reference_forward(state_small, params)
    assert out_small.shape == (8, ACTION_SIZE)
    assert jnp.allclose(out_small, ref_small, atol=1e-2, rtol=1e-2)

    # Case 2: learn()-style batch exercising the tiled path + batch padding.
    state_big = jax.random.normal(k_state2, (40, STATE_SIZE), dtype=jnp.float32)
    fwd_grid = jax.jit(functools.partial(qnetwork_forward, block_batch=16))
    out_big = jax.block_until_ready(fwd_grid(state_big, params))   # grid = (3,)
    ref_big = reference_forward(state_big, params)
    assert out_big.shape == (40, ACTION_SIZE)
    assert jnp.allclose(out_big, ref_big, atol=1e-2, rtol=1e-2)

    print("KERNEL_OK")
</pallas_src>

<mosaic_0001>
module attributes {stable_mosaic.version = 11 : i64} {
  func.func @qnetwork_kernel(%arg0: i32, %arg1: memref<8x37xf32, #tpu.memory_space<vmem>>, %arg2: memref<37x64xbf16, #tpu.memory_space<vmem>>, %arg3: memref<1x64xf32, #tpu.memory_space<vmem>>, %arg4: memref<64x128xbf16, #tpu.memory_space<vmem>>, %arg5: memref<1x128xf32, #tpu.memory_space<vmem>>, %arg6: memref<128x64xbf16, #tpu.memory_space<vmem>>, %arg7: memref<1x64xf32, #tpu.memory_space<vmem>>, %arg8: memref<64x4xbf16, #tpu.memory_space<vmem>>, %arg9: memref<1x4xf32, #tpu.memory_space<vmem>>, %arg10: memref<8x4xf32, #tpu.memory_space<vmem>>) attributes {dimension_semantics = [#tpu.dimension_semantics<parallel>], iteration_bounds = array<i64: 1>, scalar_prefetch = 0 : i64, scratch_operands = 0 : i64, tpu.core_type = #tpu.core_type<tc>, window_params = [{transform_indices = @transform_0, window_bounds = array<i64: 8, 37>}, {pipeline_mode = #tpu.pipeline_mode<synchronous>, transform_indices = @transform_1, window_bounds = array<i64: 37, 64>}, {pipeline_mode = #tpu.pipeline_mode<synchronous>, transform_indices = @transform_2, window_bounds = array<i64: 1, 64>}, {pipeline_mode = #tpu.pipeline_mode<synchronous>, transform_indices = @transform_3, window_bounds = array<i64: 64, 128>}, {pipeline_mode = #tpu.pipeline_mode<synchronous>, transform_indices = @transform_4, window_bounds = array<i64: 1, 128>}, {pipeline_mode = #tpu.pipeline_mode<synchronous>, transform_indices = @transform_5, window_bounds = array<i64: 128, 64>}, {pipeline_mode = #tpu.pipeline_mode<synchronous>, transform_indices = @transform_6, window_bounds = array<i64: 1, 64>}, {pipeline_mode = #tpu.pipeline_mode<synchronous>, transform_indices = @transform_7, window_bounds = array<i64: 64, 4>}, {pipeline_mode = #tpu.pipeline_mode<synchronous>, transform_indices = @transform_8, window_bounds = array<i64: 1, 4>}, {transform_indices = @transform_9, window_bounds = array<i64: 8, 4>}]} {
    %c0 = arith.constant 0 : index
    %c0_0 = arith.constant 0 : index
    %0 = vector.load %arg1[%c0, %c0_0] : memref<8x37xf32, #tpu.memory_space<vmem>>, vector<8x37xf32>
    %1 = arith.truncf %0 : vector<8x37xf32> to vector<8x37xbf16>
    %c0_1 = arith.constant 0 : index
    %c0_2 = arith.constant 0 : index
    %2 = vector.load %arg2[%c0_1, %c0_2] : memref<37x64xbf16, #tpu.memory_space<vmem>>, vector<37x64xbf16>
    %cst = arith.constant dense<0.000000e+00> : vector<8x64xf32>
    %3 = tpu.matmul %1, %2, %cst {dimension_numbers = #tpu.dot_dimension_numbers<[1], [0], [0], [1], [0, 0, 1, 1], [], []>} : vector<8x37xbf16>, vector<37x64xbf16>, vector<8x64xf32> -> vector<8x64xf32>
    %c0_3 = arith.constant 0 : index
    %c0_4 = arith.constant 0 : index
    %4 = vector.load %arg3[%c0_3, %c0_4] : memref<1x64xf32, #tpu.memory_space<vmem>>, vector<1x64xf32>
    %5 = vector.broadcast %4 : vector<1x64xf32> to vector<8x64xf32>
    %6 = arith.addf %3, %5 : vector<8x64xf32>
    %cst_5 = arith.constant 0.000000e+00 : f32
    %7 = vector.broadcast %cst_5 : f32 to vector<8x64xf32>
    %8 = arith.maximumf %6, %7 : vector<8x64xf32>
    %9 = arith.truncf %8 : vector<8x64xf32> to vector<8x64xbf16>
    %c0_6 = arith.constant 0 : index
    %c0_7 = arith.constant 0 : index
    %10 = vector.load %arg4[%c0_6, %c0_7] : memref<64x128xbf16, #tpu.memory_space<vmem>>, vector<64x128xbf16>
    %cst_8 = arith.constant dense<0.000000e+00> : vector<8x128xf32>
    %11 = tpu.matmul %9, %10, %cst_8 {dimension_numbers = #tpu.dot_dimension_numbers<[1], [0], [0], [1], [0, 0, 1, 1], [], []>} : vector<8x64xbf16>, vector<64x128xbf16>, vector<8x128xf32> -> vector<8x128xf32>
    %c0_9 = arith.constant 0 : index
    %c0_10 = arith.constant 0 : index
    %12 = vector.load %arg5[%c0_9, %c0_10] : memref<1x128xf32, #tpu.memory_space<vmem>>, vector<1x128xf32>
    %13 = vector.broadcast %12 : vector<1x128xf32> to vector<8x128xf32>
    %14 = arith.addf %11, %13 : vector<8x128xf32>
    %cst_11 = arith.constant 0.000000e+00 : f32
    %15 = vector.broadcast %cst_11 : f32 to vector<8x128xf32>
    %16 = arith.maximumf %14, %15 : vector<8x128xf32>
    %17 = arith.truncf %16 : vector<8x128xf32> to vector<8x128xbf16>
    %c0_12 = arith.constant 0 : index
    %c0_13 = arith.constant 0 : index
    %18 = vector.load %arg6[%c0_12, %c0_13] : memref<128x64xbf16, #tpu.memory_space<vmem>>, vector<128x64xbf16>
    %cst_14 = arith.constant dense<0.000000e+00> : vector<8x64xf32>
    %19 = tpu.matmul %17, %18, %cst_14 {dimension_numbers = #tpu.dot_dimension_numbers<[1], [0], [0], [1], [0, 0, 1, 1], [], []>} : vector<8x128xbf16>, vector<128x64xbf16>, vector<8x64xf32> -> vector<8x64xf32>
    %c0_15 = arith.constant 0 : index
    %c0_16 = arith.constant 0 : index
    %20 = vector.load %arg7[%c0_15, %c0_16] : memref<1x64xf32, #tpu.memory_space<vmem>>, vector<1x64xf32>
    %21 = vector.broadcast %20 : vector<1x64xf32> to vector<8x64xf32>
    %22 = arith.addf %19, %21 : vector<8x64xf32>
    %cst_17 = arith.constant 0.000000e+00 : f32
    %23 = vector.broadcast %cst_17 : f32 to vector<8x64xf32>
    %24 = arith.maximumf %22, %23 : vector<8x64xf32>
    %25 = arith.truncf %24 : vector<8x64xf32> to vector<8x64xbf16>
    %c0_18 = arith.constant 0 : index
    %c0_19 = arith.constant 0 : index
    %26 = vector.load %arg8[%c0_18, %c0_19] : memref<64x4xbf16, #tpu.memory_space<vmem>>, vector<64x4xbf16>
    %cst_20 = arith.constant dense<0.000000e+00> : vector<8x4xf32>
    %27 = tpu.matmul %25, %26, %cst_20 {dimension_numbers = #tpu.dot_dimension_numbers<[1], [0], [0], [1], [0, 0, 1, 1], [], []>} : vector<8x64xbf16>, vector<64x4xbf16>, vector<8x4xf32> -> vector<8x4xf32>
    %c0_21 = arith.constant 0 : index
    %c0_22 = arith.constant 0 : index
    %28 = vector.load %arg9[%c0_21, %c0_22] : memref<1x4xf32, #tpu.memory_space<vmem>>, vector<1x4xf32>
    %29 = vector.broadcast %28 : vector<1x4xf32> to vector<8x4xf32>
    %30 = arith.addf %27, %29 : vector<8x4xf32>
    %c0_23 = arith.constant 0 : index
    %c0_24 = arith.constant 0 : index
    %31 = vector.load %arg10[%c0_23, %c0_24] : memref<8x4xf32, #tpu.memory_space<vmem>>, vector<8x4xf32>
    tpu.vector_store %arg10[%c0_23, %c0_24], %30 {strides = array<i32>} : memref<8x4xf32, #tpu.memory_space<vmem>>, vector<8x4xf32>,
    return
  }
  func.func @transform_0(%arg0: i32) -> (i32, i32) {
    %c0_i32 = arith.constant 0 : i32
    %c0_i32_0 = arith.constant 0 : i32
    return %arg0, %c0_i32 : i32, i32
  }
  func.func @transform_1(%arg0: i32) -> (i32, i32) {
    %c0_i32 = arith.constant 0 : i32
    %c0_i32_0 = arith.constant 0 : i32
    %c0_i32_1 = arith.constant 0 : i32
    return %c0_i32, %c0_i32_0 : i32, i32
  }
  func.func @transform_2(%arg0: i32) -> (i32, i32) {
    %c0_i32 = arith.constant 0 : i32
    %c0_i32_0 = arith.constant 0 : i32
    %c0_i32_1 = arith.constant 0 : i32
    return %c0_i32, %c0_i32_0 : i32, i32
  }
  func.func @transform_3(%arg0: i32) -> (i32, i32) {
    %c0_i32 = arith.constant 0 : i32
    %c0_i32_0 = arith.constant 0 : i32
    %c0_i32_1 = arith.constant 0 : i32
    return %c0_i32, %c0_i32_0 : i32, i32
  }
  func.func @transform_4(%arg0: i32) -> (i32, i32) {
    %c0_i32 = arith.constant 0 : i32
    %c0_i32_0 = arith.constant 0 : i32
    %c0_i32_1 = arith.constant 0 : i32
    return %c0_i32, %c0_i32_0 : i32, i32
  }
  func.func @transform_5(%arg0: i32) -> (i32, i32) {
    %c0_i32 = arith.constant 0 : i32
    %c0_i32_0 = arith.constant 0 : i32
    %c0_i32_1 = arith.constant 0 : i32
    return %c0_i32, %c0_i32_0 : i32, i32
  }
  func.func @transform_6(%arg0: i32) -> (i32, i32) {
    %c0_i32 = arith.constant 0 : i32
    %c0_i32_0 = arith.constant 0 : i32
    %c0_i32_1 = arith.constant 0 : i32
    return %c0_i32, %c0_i32_0 : i32, i32
  }
  func.func @transform_7(%arg0: i32) -> (i32, i32) {
    %c0_i32 = arith.constant 0 : i32
    %c0_i32_0 = arith.constant 0 : i32
    %c0_i32_1 = arith.constant 0 : i32
    return %c0_i32, %c0_i32_0 : i32, i32
  }
  func.func @transform_8(%arg0: i32) -> (i32, i32) {
    %c0_i32 = arith.constant 0 : i32
    %c0_i32_0 = arith.constant 0 : i32
    %c0_i32_1 = arith.constant 0 : i32
    return %c0_i32, %c0_i32_0 : i32, i32
  }
  func.func @transform_9(%arg0: i32) -> (i32, i32) {
    %c0_i32 = arith.constant 0 : i32
    %c0_i32_0 = arith.constant 0 : i32
    return %arg0, %c0_i32 : i32, i32
  }
}

</mosaic_0001>

<llo_original>
// kernel: qnetwork_forward.1
$region0: #{qnetwork_forward.1}
  #allocation0 [shape = 'u32[]', space=smem, size = 0x4, offset = 0x4, fixed_abs, tag = 'smem constant byte address 0x4 - core index']
  #allocation1 [shape = 'u32[72,128]{1,0:T(1,128)}', space=vmem, size = 0x9000, scoped, tag = 'internal scratch']
  %s0 = inlined_call_operand.vmem [shape: f32[8,37], index: 0, kind: input, shape index: {}]
  %s1 = inlined_call_operand.vmem [shape: bf16[37,64], index: 1, kind: input, shape index: {}]
  %s2 = inlined_call_operand.vmem [shape: f32[1,64], index: 2, kind: input, shape index: {}]
  %s3 = inlined_call_operand.vmem [shape: bf16[64,128], index: 3, kind: input, shape index: {}]
  %s4 = inlined_call_operand.vmem [shape: f32[1,128], index: 4, kind: input, shape index: {}]
  %s5 = inlined_call_operand.vmem [shape: bf16[128,64], index: 5, kind: input, shape index: {}]
  %s6 = inlined_call_operand.vmem [shape: f32[1,64], index: 6, kind: input, shape index: {}]
  %s7 = inlined_call_operand.vmem [shape: bf16[64,4], index: 7, kind: input, shape index: {}]
  %s8 = inlined_call_operand.vmem [shape: f32[1,4], index: 8, kind: input, shape index: {}]
  %s9 = inlined_call_operand.vmem [shape: f32[8,4], index: 9, kind: output, shape index: {}]
  %s10 = sld [smem:[#allocation0]]
  $region46: #{qnetwork_forward.1} parent=0
    _
  %s12 = ssub.s32 1, %s10
  %s13 = scalar_select 0, %s12, %s10
  // Predicated region
  $region2: #{qnetwork_forward.1} parent=0 // pred_check
    _
  $region3: #{qnetwork_forward.1} parent=0 // pred_check_branch
    %15 = sbr.rel (0) target = $region5
  $region4: #{qnetwork_forward.1} parent=0 // pred_region
    _
  $region5: #{qnetwork_forward.1} parent=0 // pred_fallthru
    _
  // Predicated region
  $region6: #{qnetwork_forward.1} parent=0 // pred_check
    _
  $region7: #{qnetwork_forward.1} parent=0 // pred_check_branch
    %17 = sbr.rel (0) target = $region9
  $region8: #{qnetwork_forward.1} parent=0 // pred_region
    _
  $region9: #{qnetwork_forward.1} parent=0 // pred_fallthru
    _
  // Predicated region
  $region10: #{qnetwork_forward.1} parent=0 // pred_check
    _
  $region11: #{qnetwork_forward.1} parent=0 // pred_check_branch
    %19 = sbr.rel (0) target = $region13
  $region12: #{qnetwork_forward.1} parent=0 // pred_region
    _
  $region13: #{qnetwork_forward.1} parent=0 // pred_fallthru
    _
  // Predicated region
  $region14: #{qnetwork_forward.1} parent=0 // pred_check
    _
  $region15: #{qnetwork_forward.1} parent=0 // pred_check_branch
    %21 = sbr.rel (0) target = $region17
  $region16: #{qnetwork_forward.1} parent=0 // pred_region
    _
  $region17: #{qnetwork_forward.1} parent=0 // pred_fallthru
    _
  // Predicated region
  $region18: #{qnetwork_forward.1} parent=0 // pred_check
    _
  $region19: #{qnetwork_forward.1} parent=0 // pred_check_branch
    %23 = sbr.rel (0) target = $region21
  $region20: #{qnetwork_forward.1} parent=0 // pred_region
    _
  $region21: #{qnetwork_forward.1} parent=0 // pred_fallthru
    _
  // Predicated region
  $region22: #{qnetwork_forward.1} parent=0 // pred_check
    _
  $region23: #{qnetwork_forward.1} parent=0 // pred_check_branch
    %25 = sbr.rel (0) target = $region25
  $region24: #{qnetwork_forward.1} parent=0 // pred_region
    _
  $region25: #{qnetwork_forward.1} parent=0 // pred_fallthru
    _
  // Predicated region
  $region26: #{qnetwork_forward.1} parent=0 // pred_check
    _
  $region27: #{qnetwork_forward.1} parent=0 // pred_check_branch
    %27 = sbr.rel (0) target = $region29
  $region28: #{qnetwork_forward.1} parent=0 // pred_region
    _
  $region29: #{qnetwork_forward.1} parent=0 // pred_fallthru
    _
  // Predicated region
  $region30: #{qnetwork_forward.1} parent=0 // pred_check
    _
  $region31: #{qnetwork_forward.1} parent=0 // pred_check_branch
    %29 = sbr.rel (0) target = $region33
  $region32: #{qnetwork_forward.1} parent=0 // pred_region
    _
  $region33: #{qnetwork_forward.1} parent=0 // pred_fallthru
    _
  // Predicated region
  $region34: #{qnetwork_forward.1} parent=0 // pred_check
    _
  $region35: #{qnetwork_forward.1} parent=0 // pred_check_branch
    %31 = sbr.rel (0) target = $region37
  $region36: #{qnetwork_forward.1} parent=0 // pred_region
    _
  $region37: #{qnetwork_forward.1} parent=0 // pred_fallthru
    _
  %v33 = vld [vmem:[%s0] sm:$0xff]
  %v34 = vpack.c.bf16 %v33, %v33
  %v35 = vld [vmem:[%s1] sm:$0xf]
  %v36 = vld [vmem:[%s1 + $0x4] sm:$0xf]
  %v37 = vld [vmem:[%s1 + $0x8] sm:$0xf]
  %v38 = vld [vmem:[%s1 + $0xc] sm:$0xf]
  %v39 = vld [vmem:[%s1 + $0x10] sm:$0x7]
  %v40 = vld [vmem:[%s2] sm:$0x1]
  %v42 = vperm.slane %v40, 0
  %v49 = vunpack.c.l.b16 %v35
  %v50 = vunpack.c.l.b16 %v36
  %v51 = vunpack.c.l.b16 %v37
  %v52 = vunpack.c.l.b16 %v38
  %v53 = vunpack.c.l.b16 %v39
  %v54 = vpack.c.b16 %v50, %v49
  %v55 = vpack.c.b16 %v52, %v51
  %v56 = vpack.c.b16 %v53, %v53
  %vm59 = vcmask 302080
  %v61 = vsel %vm59, %v34, 0
  %vm63 = vcmask 1041408
  %vm64 = vcmask 1042432
  %v65 = vsel %vm63, 4294967295, 65535
  %v66 = vsel %vm64, %v65, 0
  %v68 = vand.u32 %v56, %v66
  %70 = vmatpush.bf16.msra.mxu0 0
  %71 = vmatpush.bf16.msra.mxu0 0
  %72 = vmatpush.bf16.msra.mxu0 0
  %73 = vmatpush.bf16.msra.mxu0 0
  %74 = vmatpush.bf16.msra.mxu0 0
  %75 = vmatpush.bf16.msra.mxu0 %v68
  %76 = vmatpush.bf16.msra.mxu0 %v55
  %77 = vmatpush.bf16.msra.mxu0 %v54
  %78 = vmatmul.bf16.gmra.mxu0 %v61
  %v79 = vpop.f32.mrf.mxu0
  %v80 = vadd.f32 %v42, %v79
  %v81 = vpop.f32.mrf.mxu0
  %82 = vdwg.mxu0
  %v83 = vmax.f32 %v80, 0.0
  %v84 = vpack.c.bf16 %v83, %v83
  %v85 = vld [vmem:[%s3] sm:$0xf]
  %v86 = vld [vmem:[%s3 + $0x4] sm:$0xf]
  %v87 = vld [vmem:[%s3 + $0x8] sm:$0xf]
  %v88 = vld [vmem:[%s3 + $0xc] sm:$0xf]
  %v89 = vld [vmem:[%s3 + $0x10] sm:$0xf]
  %v90 = vld [vmem:[%s3 + $0x14] sm:$0xf]
  %v91 = vld [vmem:[%s3 + $0x18] sm:$0xf]
  %v92 = vld [vmem:[%s3 + $0x1c] sm:$0xf]
  %v93 = vld [vmem:[%s4] sm:$0x1]
  %v95 = vperm.slane %v93, 0
  %v105 = vunpack.c.l.b16 %v85
  %v106 = vunpack.c.l.b16 %v86
  %v107 = vunpack.c.l.b16 %v87
  %v108 = vunpack.c.l.b16 %v88
  %v109 = vunpack.c.l.b16 %v89
  %v110 = vunpack.c.l.b16 %v90
  %v111 = vunpack.c.l.b16 %v91
  %v112 = vunpack.c.l.b16 %v92
  %v113 = vpack.c.b16 %v106, %v105
  %v114 = vpack.c.b16 %v108, %v107
  %v115 = vpack.c.b16 %v110, %v109
  %v116 = vpack.c.b16 %v112, %v111
  %vm121 = vcmask 523264
  %v123 = vsel %vm121, %v84, 0
  %125 = vmatpush.bf16.msra.mxu0 0
  %126 = vmatpush.bf16.msra.mxu0 0
  %127 = vmatpush.bf16.msra.mxu0 0
  %128 = vmatpush.bf16.msra.mxu0 0
  %129 = vmatpush.bf16.msra.mxu0 %v116
  %130 = vmatpush.bf16.msra.mxu0 %v115
  %131 = vmatpush.bf16.msra.mxu0 %v114
  %132 = vmatpush.bf16.msra.mxu0 %v113
  %133 = vmatmul.bf16.gmra.mxu0 %v123
  %v134 = vpop.f32.mrf.mxu0
  %v135 = vadd.f32 %v95, %v134
  %v136 = vpop.f32.mrf.mxu0
  %137 = vdwg.mxu0
  %v138 = vmax.f32 %v135, 0.0
  %v139 = vpack.c.bf16 %v138, %v138
  %v140 = vld [vmem:[%s5] sm:$0xf]
  %v141 = vld [vmem:[%s5 + $0x4] sm:$0xf]
  %v142 = vld [vmem:[%s5 + $0x8] sm:$0xf]
  %v143 = vld [vmem:[%s5 + $0xc] sm:$0xf]
  %v144 = vld [vmem:[%s5 + $0x10] sm:$0xf]
  %v145 = vld [vmem:[%s5 + $0x14] sm:$0xf]
  %v146 = vld [vmem:[%s5 + $0x18] sm:$0xf]
  %v147 = vld [vmem:[%s5 + $0x1c] sm:$0xf]
  %v148 = vld [vmem:[%s5 + $0x20] sm:$0xf]
  %v149 = vld [vmem:[%s5 + $0x24] sm:$0xf]
  %v150 = vld [vmem:[%s5 + $0x28] sm:$0xf]
  %v151 = vld [vmem:[%s5 + $0x2c] sm:$0xf]
  %v152 = vld [vmem:[%s5 + $0x30] sm:$0xf]
  %v153 = vld [vmem:[%s5 + $0x34] sm:$0xf]
  %v154 = vld [vmem:[%s5 + $0x38] sm:$0xf]
  %v155 = vld [vmem:[%s5 + $0x3c] sm:$0xf]
  %v156 = vld [vmem:[%s6] sm:$0x1]
  %v158 = vperm.slane %v156, 0
  %v176 = vunpack.c.l.b16 %v140
  %v177 = vunpack.c.l.b16 %v141
  %v178 = vunpack.c.l.b16 %v142
  %v179 = vunpack.c.l.b16 %v143
  %v180 = vunpack.c.l.b16 %v144
  %v181 = vunpack.c.l.b16 %v145
  %v182 = vunpack.c.l.b16 %v146
  %v183 = vunpack.c.l.b16 %v147
  %v184 = vunpack.c.l.b16 %v148
  %v185 = vunpack.c.l.b16 %v149
  %v186 = vunpack.c.l.b16 %v150
  %v187 = vunpack.c.l.b16 %v151
  %v188 = vunpack.c.l.b16 %v152
  %v189 = vunpack.c.l.b16 %v153
  %v190 = vunpack.c.l.b16 %v154
  %v191 = vunpack.c.l.b16 %v155
  %v192 = vpack.c.b16 %v177, %v176
  %v193 = vpack.c.b16 %v179, %v178
  %v194 = vpack.c.b16 %v181, %v180
  %v195 = vpack.c.b16 %v183, %v182
  %v196 = vpack.c.b16 %v185, %v184
  %v197 = vpack.c.b16 %v187, %v186
  %v198 = vpack.c.b16 %v189, %v188
  %v199 = vpack.c.b16 %v191, %v190
  %208 = vmatpush.bf16.msra.mxu0 %v199
  %209 = vmatpush.bf16.msra.mxu0 %v198
  %210 = vmatpush.bf16.msra.mxu0 %v197
  %211 = vmatpush.bf16.msra.mxu0 %v196
  %212 = vmatpush.bf16.msra.mxu0 %v195
  %213 = vmatpush.bf16.msra.mxu0 %v194
  %214 = vmatpush.bf16.msra.mxu0 %v193
  %215 = vmatpush.bf16.msra.mxu0 %v192
  %216 = vmatmul.bf16.gmra.mxu0 %v139
  %v217 = vpop.f32.mrf.mxu0
  %v218 = vadd.f32 %v158, %v217
  %v219 = vpop.f32.mrf.mxu0
  %220 = vdwg.mxu0
  %v221 = vmax.f32 %v218, 0.0
  %v222 = vpack.c.bf16 %v221, %v221
  %v223 = vld [vmem:[%s7] sm:$0xf]
  %v224 = vld [vmem:[%s7 + $0x4] sm:$0xf]
  %v225 = vld [vmem:[%s7 + $0x8] sm:$0xf]
  %v226 = vld [vmem:[%s7 + $0xc] sm:$0xf]
  %v227 = vld [vmem:[%s7 + $0x10] sm:$0xf]
  %v228 = vld [vmem:[%s7 + $0x14] sm:$0xf]
  %v229 = vld [vmem:[%s7 + $0x18] sm:$0xf]
  %v230 = vld [vmem:[%s7 + $0x1c] sm:$0xf]
  %v231 = vld [vmem:[%s8] sm:$0x1]
  %v233 = vperm.slane %v231, 0
  %v243 = vunpack.c.l.b16 %v223
  %v244 = vunpack.c.l.b16 %v224
  %v245 = vunpack.c.l.b16 %v225
  %v246 = vunpack.c.l.b16 %v226
  %v247 = vunpack.c.l.b16 %v227
  %v248 = vunpack.c.l.b16 %v228
  %v249 = vunpack.c.l.b16 %v229
  %v250 = vunpack.c.l.b16 %v230
  %v251 = vpack.c.b16 %v244, %v243
  %v252 = vpack.c.b16 %v246, %v245
  %v253 = vpack.c.b16 %v248, %v247
  %v254 = vpack.c.b16 %v250, %v249
  %v260 = vsel %vm121, %v222, 0
  %262 = vmatpush.bf16.msra.mxu0 0
  %263 = vmatpush.bf16.msra.mxu0 0
  %264 = vmatpush.bf16.msra.mxu0 0
  %265 = vmatpush.bf16.msra.mxu0 0
  %266 = vmatpush.bf16.msra.mxu0 %v254
  %267 = vmatpush.bf16.msra.mxu0 %v253
  %268 = vmatpush.bf16.msra.mxu0 %v252
  %269 = vmatpush.bf16.msra.mxu0 %v251
  %270 = vmatmul.bf16.gmra.mxu0 %v260
  %v271 = vpop.f32.mrf.mxu0
  %v272 = vadd.f32 %v233, %v271
  %v273 = vpop.f32.mrf.mxu0
  %274 = vdwg.mxu0
  %vm275 = vcmask 31744
  %276 = vst.msk [vmem:[%s9] sm:$0xff] %vm275, %v272
  // Predicated region
  $region38: #{qnetwork_forward.1} parent=0 // pred_check
    _
  $region39: #{qnetwork_forward.1} parent=0 // pred_check_branch
    %278 = sbr.rel (0) target = $region41
  $region40: #{qnetwork_forward.1} parent=0 // pred_region
    _
  $region41: #{qnetwork_forward.1} parent=0 // pred_fallthru
    _
  // Predicated region
  $region42: #{qnetwork_forward.1} parent=0 // pred_check
    _
  $region43: #{qnetwork_forward.1} parent=0 // pred_check_branch
    %280 = sbr.rel (0) target = $region45
  $region44: #{qnetwork_forward.1} parent=0 // pred_region
    _
  $region45: #{qnetwork_forward.1} parent=0 // pred_fallthru
    _

</llo_original>
